<compile_context>
chip_gen: v7x
topology: tpu7x:2x2x1
jax: 0.10.0
libtpu: 0.0.40
codegen_flags: <defaults>
</compile_context>

<pallas_src>
import math

import jax
import jax.numpy as jnp
from jax.experimental import pallas as pl
from jax.experimental.pallas import tpu as pltpu


def token_embedding_kernel(x_ref, w_ref, o_ref):
    # x_ref: (TM, 3C) im2col'd input rows, w_ref: (3C, TN), o_ref: (TM, TN).
    # Single fused MXU dot (K = 3C is lane-padded to 128 on the MXU anyway).
    o_ref[...] = jnp.dot(
        x_ref[...], w_ref[...], preferred_element_type=jnp.float32
    ).astype(o_ref.dtype)


def prepare_weight(weight):
    """Torch-layout Conv1d weight (d_model, c_in, 3) -> im2col matrix (3*c_in, d_model).

    Hoist/cache this outside the hot path for repeated inference.
    w_cat[k*c_in + c, d] = weight[d, c, k].
    """
    d_model = weight.shape[0]
    return jnp.transpose(weight, (2, 1, 0)).reshape(-1, d_model)


def _largest_divisor(n, cap, step):
    """Largest d <= cap with d % step == 0 and n % d == 0, or None."""
    best = None
    d = step
    while d <= min(n, cap):
        if n % d == 0:
            best = d
        d += step
    return best


def _pick_tiles(M, N):
    # Lane (N) tile: multiple of 128 dividing N when possible, else full N.
    # (If d_model is ever not 128-aligned, the fallback gives masked partial
    #  stores; pad d_model up in the wrapper if that path matters on v5e.)
    TN = _largest_divisor(N, 512, 128) or N
    # Sublane (M) tile: multiple of 8 dividing M when possible, else full M
    # (a full-extent block is always legal regardless of (8,128) alignment).
    TM = _largest_divisor(M, 512, 8) or M
    # Guarantee >=2 "parallel" grid steps when splittable so both of v7x's
    # TensorCores get work (irrelevant but harmless on v5e/v6e).
    if (M // TM) * (N // TN) < 2:
        tm_half = _largest_divisor(M, max(TM // 2, 8), 8)
        tn_half = _largest_divisor(N, max(TN // 2, 128), 128)
        if tm_half is not None and tm_half < TM:
            TM = tm_half
        elif tn_half is not None and tn_half < TN:
            TN = tn_half
    return TM, TN


def token_embedding(x, w_cat, *, out_dtype=None):
    """x: (B, L, c_in); w_cat: (3*c_in, d_model) from prepare_weight().

    Returns (B, L, d_model). out_dtype=jnp.bfloat16 is an opt-in semantics
    change (halves output HBM writeback); default preserves x.dtype (f32).
    """
    B, L, C = x.shape
    K, D = w_cat.shape
    assert K == 3 * C
    out_dtype = out_dtype or x.dtype

    # Wrapper-side circular wrap + im2col (tiny vs. the (B, L, D) output).
    x_prev = jnp.roll(x, 1, axis=1)    # x[b, (t-1) % L]
    x_next = jnp.roll(x, -1, axis=1)   # x[b, (t+1) % L]
    x_cat = jnp.concatenate([x_prev, x, x_next], axis=-1).reshape(B * L, K)

    M = B * L
    TM, TN = _pick_tiles(M, D)
    nm, nn = M // TM, D // TN

    out2d = pl.pallas_call(
        token_embedding_kernel,
        out_shape=jax.ShapeDtypeStruct((M, D), out_dtype),
        grid_spec=pltpu.PrefetchScalarGridSpec(
            num_scalar_prefetch=0,
            # m is the inner axis -> the weight tile's block index is constant
            # across the inner loop, so it is not re-DMA'd every step.
            grid=(nn, nm),
            in_specs=[
                pl.BlockSpec((TM, K), lambda n, m: (m, 0)),
                pl.BlockSpec((K, TN), lambda n, m: (0, n)),
            ],
            out_specs=pl.BlockSpec((TM, TN), lambda n, m: (m, n)),
        ),
        compiler_params=pltpu.CompilerParams(
            dimension_semantics=("parallel", "parallel")),
    )(x_cat, w_cat)
    return out2d.reshape(B, L, D)


def _reference(x, weight):
    # Pure-JAX ground truth of the circular Conv1d (pad-and-slice form,
    # independent of the roll/im2col formulation used by the kernel path).
    B, L, C = x.shape
    x_pad = jnp.concatenate([x[:, -1:, :], x, x[:, :1, :]], axis=1)   # (B, L+2, C)
    w = jnp.transpose(weight, (2, 1, 0))                               # (3, C, D)
    out = (jnp.einsum('blc,cd->bld', x_pad[:, 0:L, :], w[0]) +
           jnp.einsum('blc,cd->bld', x_pad[:, 1:L + 1, :], w[1]) +
           jnp.einsum('blc,cd->bld', x_pad[:, 2:L + 2, :], w[2]))
    return out


def _kaiming_weight(key, d_model, c_in):
    # kaiming_normal_(mode='fan_in', nonlinearity='leaky_relu') on (D, C, 3)
    fan_in = c_in * 3
    gain = math.sqrt(2.0 / (1.0 + 0.01 ** 2))
    std = gain / math.sqrt(fan_in)
    return std * jax.random.normal(key, (d_model, c_in, 3), dtype=jnp.float32)


if __name__ == "__main__":
    key = jax.random.PRNGKey(0)
    emb = jax.jit(token_embedding)

    # Case 1: small Informer-like shapes (7 channels, d_model=128, lane-dense).
    B, L, c_in, d_model = 2, 8, 7, 128
    kx, kw, key = jax.random.split(key, 3)
    x = jax.random.normal(kx, (B, L, c_in), dtype=jnp.float32)
    weight = _kaiming_weight(kw, d_model, c_in)

    out = jax.block_until_ready(emb(x, prepare_weight(weight)))
    ref = _reference(x, weight)
    assert out.shape == (B, L, d_model)
    assert jnp.allclose(out, ref, atol=1e-4, rtol=1e-4)

    # Case 2: L not a multiple of 8 (exercises the full-extent M-block fallback).
    B2, L2 = 2, 25
    kx2, kw2, key = jax.random.split(key, 3)
    x2 = jax.random.normal(kx2, (B2, L2, c_in), dtype=jnp.float32)
    weight2 = _kaiming_weight(kw2, d_model, c_in)

    out2 = jax.block_until_ready(emb(x2, prepare_weight(weight2)))
    ref2 = _reference(x2, weight2)
    assert out2.shape == (B2, L2, d_model)
    assert jnp.allclose(out2, ref2, atol=1e-4, rtol=1e-4)

    print("KERNEL_OK")
</pallas_src>

<mosaic_0001>
module attributes {stable_mosaic.version = 11 : i64} {
  func.func @token_embedding_kernel(%arg0: i32, %arg1: i32, %arg2: memref<8x21xf32, #tpu.memory_space<vmem>>, %arg3: memref<21x128xf32, #tpu.memory_space<vmem>>, %arg4: memref<8x128xf32, #tpu.memory_space<vmem>>) attributes {dimension_semantics = [#tpu.dimension_semantics<parallel>, #tpu.dimension_semantics<parallel>], iteration_bounds = array<i64: 1, 2>, scalar_prefetch = 0 : i64, scratch_operands = 0 : i64, tpu.core_type = #tpu.core_type<tc>, window_params = [{transform_indices = @transform_0, window_bounds = array<i64: 8, 21>}, {transform_indices = @transform_1, window_bounds = array<i64: 21, 128>}, {transform_indices = @transform_2, window_bounds = array<i64: 8, 128>}]} {
    %c0 = arith.constant 0 : index
    %c0_0 = arith.constant 0 : index
    %0 = vector.load %arg2[%c0, %c0_0] : memref<8x21xf32, #tpu.memory_space<vmem>>, vector<8x21xf32>
    %c0_1 = arith.constant 0 : index
    %c0_2 = arith.constant 0 : index
    %1 = vector.load %arg3[%c0_1, %c0_2] : memref<21x128xf32, #tpu.memory_space<vmem>>, vector<21x128xf32>
    %cst = arith.constant dense<0.000000e+00> : vector<8x128xf32>
    %2 = tpu.matmul %0, %1, %cst {dimension_numbers = #tpu.dot_dimension_numbers<[1], [0], [0], [1], [0, 0, 1, 1], [], []>} : vector<8x21xf32>, vector<21x128xf32>, vector<8x128xf32> -> vector<8x128xf32>
    %c0_3 = arith.constant 0 : index
    %c0_4 = arith.constant 0 : index
    %3 = vector.load %arg4[%c0_3, %c0_4] : memref<8x128xf32, #tpu.memory_space<vmem>>, vector<8x128xf32>
    tpu.vector_store %arg4[%c0_3, %c0_4], %2 {strides = array<i32>} : memref<8x128xf32, #tpu.memory_space<vmem>>, vector<8x128xf32>,
    return
  }
  func.func @transform_0(%arg0: i32, %arg1: i32) -> (i32, i32) {
    %c0_i32 = arith.constant 0 : i32
    %c0_i32_0 = arith.constant 0 : i32
    return %arg1, %c0_i32 : i32, i32
  }
  func.func @transform_1(%arg0: i32, %arg1: i32) -> (i32, i32) {
    %c0_i32 = arith.constant 0 : i32
    %c0_i32_0 = arith.constant 0 : i32
    return %c0_i32, %arg0 : i32, i32
  }
  func.func @transform_2(%arg0: i32, %arg1: i32) -> (i32, i32) {
    %c0_i32 = arith.constant 0 : i32
    return %arg1, %arg0 : i32, i32
  }
}

</mosaic_0001>

<llo_original>
// kernel: token_embedding.1
$region0: #{token_embedding.1}
  #allocation0 [shape = 'u32[]', space=smem, size = 0x4, offset = 0x4, fixed_abs, tag = 'smem constant byte address 0x4 - core index']
  #allocation1 [shape = 'u32[144,128]{1,0:T(1,128)}', space=vmem, size = 0x12000, scoped, tag = 'internal scratch']
  %s0 = inlined_call_operand.vmem [shape: f32[16,21], index: 0, kind: input, shape index: {}]
  %s1 = inlined_call_operand.vmem [shape: f32[21,128], index: 1, kind: input, shape index: {}]
  %s2 = inlined_call_operand.hbm [shape: f32[16,128], index: 2, kind: output, shape index: {}]
  %s3 = sld [smem:[#allocation0]]
  $region41: #{token_embedding.1} parent=0
    _
  %s5 = ssub.s32 1, %s3
  %s6 = scalar_select 0, %s5, %s3
  $region1: #{token_embedding.1} parent=0
    #allocation2 [shape = 'u8[8192]{0}', space=vmem, size = 0x2000, scoped, tag = 'output window, operand 0']
    #allocation3 [shape = 's32[2]{0}', space=sflag, size = 0x8, scoped, tag = 'scoped memory for token_embedding.1']
    %7 = vsyncpa [#allocation3], 0
    %s8 = scalar_lea.sflag [#allocation3], 1
    %9 = vsyncpa %s8, 0
    loop: start=0, step=1, limit=4
    $region2: #{token_embedding.1} parent=1 // loop_pre_header
      _
    $region3: #{token_embedding.1} parent=1 // loop_header
      %s11 = sphi 0, %s15
      %p12 = scmp.ge.s32.totalorder %s11, 4
      %s18 = sphi 0, %s30
      %s19 = sphi 0, %s26
      %s20 = sphi 0, %s18
      %s21 = sphi 0, %s19
      %s22 = sphi 0, %s20
      %s23 = sphi 0, %s21
      %s33 = sphi 0, %s35
      %s36 = sphi 0, %s33
      %s37 = sphi 0, %s36
      %s53 = sphi 0, %s37
      %s59 = sphi 0, %s61
      %s62 = sphi 0, %s59
      %s63 = sphi 0, %s62
      %s79 = sphi 0, %s63
      %s87 = sphi 0, %s89
      %s90 = sphi 0, %s87
      %s91 = sphi 0, %s90
      %s107 = sphi 0, %s91
    $region4: #{token_embedding.1} parent=1 // loop_header_branch
      %14 = sbr.rel (%p12) target = $region8
    $region5: #{token_embedding.1} parent=1 // loop_body
      %s16 = ssub.s32 %s11, 1
      %s17 = ssub.s32 %s11, 2
      %s24 = sadd.s32 1, %s19
      %p25 = scmp.ge.s32.totalorder %s24, 2
      %s26 = scalar_select %p25, 0, %s24
      %s27 = sadd.s32 1, %s18
      %s28 = scalar_select %p25, %s27, %s18
      %p29 = scmp.ge.s32.totalorder %s28, 1
      %s30 = scalar_select %p29, 0, %s28
      %s31 = ssub.s32 %s19, %s26
      %p32 = scmp.eq.s32.totalorder %s31, 0
      %s34 = sadd.s32 %s33, 1
      %s35 = scalar_select %p32, %s33, %s34
      %p38 = pneg %p32
      %p39 = scmp.eq.s32.totalorder %s11, 1
      %p40 = por %p38, %p39
      %p41 = scmp.ne.s32.totalorder %s33, %s36
      %p42 = scmp.eq.s32.totalorder %s11, 0
      %p43 = por %p41, %p42
      %p44 = scmp.ne.s32.totalorder %s33, %s36
      %p45 = scmp.eq.s32.totalorder %s16, 1
      %p46 = por %p44, %p45
      %p47 = scmp.ne.s32.totalorder %s36, %s37
      %p48 = scmp.eq.s32.totalorder %s16, 0
      %p49 = por %p47, %p48
      %p50 = scmp.ne.s32.totalorder %s36, %s37
      %p51 = scmp.eq.s32.totalorder %s17, 1
      %p52 = por %p50, %p51
      %p54 = scmp.ne.s32.totalorder %s37, %s53
      %p55 = scmp.eq.s32.totalorder %s17, 0
      %p56 = por %p54, %p55
      %s57 = ssub.s32 %s18, %s30
      %p58 = scmp.eq.s32.totalorder %s57, 0
      %s60 = sadd.s32 %s59, 1
      %s61 = scalar_select %p58, %s59, %s60
      %p64 = pneg %p58
      %p65 = scmp.eq.s32.totalorder %s11, 1
      %p66 = por %p64, %p65
      %p67 = scmp.ne.s32.totalorder %s59, %s62
      %p68 = scmp.eq.s32.totalorder %s11, 0
      %p69 = por %p67, %p68
      %p70 = scmp.ne.s32.totalorder %s59, %s62
      %p71 = scmp.eq.s32.totalorder %s16, 1
      %p72 = por %p70, %p71
      %p73 = scmp.ne.s32.totalorder %s62, %s63
      %p74 = scmp.eq.s32.totalorder %s16, 0
      %p75 = por %p73, %p74
      %p76 = scmp.ne.s32.totalorder %s62, %s63
      %p77 = scmp.eq.s32.totalorder %s17, 1
      %p78 = por %p76, %p77
      %p80 = scmp.ne.s32.totalorder %s63, %s79
      %p81 = scmp.eq.s32.totalorder %s17, 0
      %p82 = por %p80, %p81
      %s83 = ssub.s32 %s19, %s26
      %s84 = ssub.s32 %s18, %s30
      %s85 = sor.u32 %s83, %s84
      %p86 = scmp.eq.s32.totalorder %s85, 0
      %s88 = sadd.s32 %s87, 1
      %s89 = scalar_select %p86, %s87, %s88
      %p92 = pneg %p86
      %p93 = scmp.eq.s32.totalorder %s11, 1
      %p94 = por %p92, %p93
      %p95 = scmp.ne.s32.totalorder %s87, %s90
      %p96 = scmp.eq.s32.totalorder %s11, 0
      %p97 = por %p95, %p96
      %p98 = scmp.ne.s32.totalorder %s87, %s90
      %p99 = scmp.eq.s32.totalorder %s16, 1
      %p100 = por %p98, %p99
      %p101 = scmp.ne.s32.totalorder %s90, %s91
      %p102 = scmp.eq.s32.totalorder %s16, 0
      %p103 = por %p101, %p102
      %p104 = scmp.ne.s32.totalorder %s90, %s91
      %p105 = scmp.eq.s32.totalorder %s17, 1
      %p106 = por %p104, %p105
      %p108 = scmp.ne.s32.totalorder %s91, %s107
      %p109 = scmp.eq.s32.totalorder %s17, 0
      %p110 = por %p108, %p109
      %p111 = scmp.le.s32.totalorder 1, %s11
      %p112 = scmp.lt.s32.totalorder %s11, 3
      %p113 = pnand %p111, %p112
      %p114 = pneg %p113
      // Predicated region
      $region9: #{token_embedding.1} parent=5 // pred_check
        _
      $region10: #{token_embedding.1} parent=5 // pred_check_branch
        %116 = sbr.rel (%p113) target = $region12
      $region11: #{token_embedding.1} parent=5 // pred_region
        %s117 = ssub.s32 %s11, 1
        // Predicated region
        $region13: #{token_embedding.1} parent=11 // pred_check
          %p118 = pneg %p75
        $region14: #{token_embedding.1} parent=11 // pred_check_branch
          %120 = sbr.rel (%p118) target = $region16
        $region15: #{token_embedding.1} parent=11 // pred_region
          %p121 = scmp.lt.s32.totalorder %s20, 0
          %s122 = scalar_select %p121, %s20, 0
          %s123 = smul.addr %s122, 8
          %s124 = scalar_lea.vmem %s1, %s123
        $region16: #{token_embedding.1} parent=11 // pred_fallthru
          _
      $region12: #{token_embedding.1} parent=5 // pred_fallthru
        _
      %p125 = scmp.lt.s32.totalorder %s11, 2
      // Predicated region
      $region17: #{token_embedding.1} parent=5 // pred_check
        %p126 = pneg %p125
      $region18: #{token_embedding.1} parent=5 // pred_check_branch
        %128 = sbr.rel (%p126) target = $region20
      $region19: #{token_embedding.1} parent=5 // pred_region
        // Predicated region
        $region21: #{token_embedding.1} parent=19 // pred_check
          %p129 = pneg %p43
        $region22: #{token_embedding.1} parent=19 // pred_check_branch
          %131 = sbr.rel (%p129) target = $region24
        $region23: #{token_embedding.1} parent=19 // pred_region
          %p132 = scmp.lt.s32.totalorder %s19, 1
          %s133 = scalar_select %p132, %s19, 1
          %s134 = smul.addr %s133, 8
          %s135 = scalar_lea.vmem %s0, %s134
        $region24: #{token_embedding.1} parent=19 // pred_fallthru
          _
      $region20: #{token_embedding.1} parent=5 // pred_fallthru
        _
      %p136 = scmp.le.s32.totalorder 1, %s11
      %p137 = scmp.lt.s32.totalorder %s11, 3
      %p138 = pnand %p136, %p137
      %p139 = pneg %p138
      // Predicated region
      $region25: #{token_embedding.1} parent=5 // pred_check
        _
      $region26: #{token_embedding.1} parent=5 // pred_check_branch
        %141 = sbr.rel (%p138) target = $region28
      $region27: #{token_embedding.1} parent=5 // pred_region
        %s142 = ssub.s32 %s11, 1
        %p143 = scmp.lt.s32.totalorder %s21, 1
        %s144 = scalar_select %p143, %s21, 1
        %s145 = smul.addr %s144, 8
        %s146 = scalar_lea.vmem %s0, %s145
        %p147 = pneg %p49
        %p148 = pneg %p46
        %p149 = scmp.lt.s32.totalorder %s20, 0
        %s150 = scalar_select %p149, %s20, 0
        %s151 = smul.addr %s150, 8
        %s152 = scalar_lea.vmem %s1, %s151
        %p153 = pneg %p75
        %p154 = pneg %p72
        %p155 = pneg %p103
        %p156 = pneg %p100
        %s157 = sand.u32 %s90, 1
        %s158 = scalar_lea.sflag [#allocation3], %s157
        %s159 = sand.u32 %s90, 1
        %s160 = smul.addr %s159, 8
        %s161 = scalar_lea.vmem [#allocation2], %s160
        %p162 = scmp.lt.s32.totalorder %s21, 1
        %s163 = scalar_select %p162, %s21, 1
        %s164 = smul.addr %s163, 8
        %s165 = scalar_lea.vmem %s0, %s164
        %p166 = scmp.lt.s32.totalorder %s20, 0
        %s167 = scalar_select %p166, %s20, 0
        %s168 = smul.addr %s167, 8
        %s169 = scalar_lea.vmem %s1, %s168
        %v170 = vld [vmem:[%s165] sm:$0xff]
        %v171 = vld [vmem:[%s169] sm:$0xff]
        %v172 = vld [vmem:[%s169 + $0x8] sm:$0xff]
        %v173 = vld [vmem:[%s169 + $0x10] sm:$0x1f]
        %vm174 = vcmask 171008
        %v176 = vsel %vm174, %v170, 0
        %vm178 = vcmask 1044480
        %v180 = vsel %vm178, %v173, 0
        %182 = vmatprep.subr.mxu0 0.0
        %183 = vmatpush1.msra.mxu0 %v171
        %184 = vmatprep.subr.mxu0 0.0
        %185 = vmatpush1.msra.mxu0 %v172
        %186 = vmatprep.subr.mxu0 0.0
        %187 = vmatpush1.msra.mxu0 %v180
        %188 = vmatprep.subr.mxu0 0.0
        %189 = vmatpush1.msra.mxu0 0.0
        %190 = vmatprep.subr.mxu0 0.0
        %191 = vmatpush1.msra.mxu0 0.0
        %192 = vmatprep.subr.mxu0 0.0
        %193 = vmatpush1.msra.mxu0 0.0
        %194 = vmatprep.subr.mxu0 0.0
        %195 = vmatpush1.msra.mxu0 0.0
        %196 = vmatprep.subr.mxu0 0.0
        %197 = vmatpush1.msra.mxu0 0.0
        %198 = vmatprep.subr.mxu0 0.0
        %199 = vmatpush1.msra.mxu0 0.0
        %200 = vmatprep.subr.mxu0 0.0
        %201 = vmatpush1.msra.mxu0 0.0
        %202 = vmatprep.subr.mxu0 0.0
        %203 = vmatpush1.msra.mxu0 0.0
        %204 = vmatprep.subr.mxu0 0.0
        %205 = vmatpush1.msra.mxu0 0.0
        %206 = vmatprep.subr.mxu0 0.0
        %207 = vmatpush1.msra.mxu0 0.0
        %208 = vmatprep.subr.mxu0 0.0
        %209 = vmatpush1.msra.mxu0 0.0
        %210 = vmatprep.subr.mxu0 0.0
        %211 = vmatpush1.msra.mxu0 0.0
        %212 = vmatprep.subr.mxu0 0.0
        %213 = vmatpush1.msra.mxu0 0.0
        %214 = vmatprep.subr.mxu0 0.0
        %215 = vmatpush1.msra.mxu0 0.0
        %216 = vmatprep.subr.mxu0 0.0
        %217 = vmatpush1.msra.mxu0 0.0
        %218 = vmatprep.subr.mxu0 0.0
        %219 = vmatpush1.msra.mxu0 0.0
        %220 = vmatprep.subr.mxu0 0.0
        %221 = vmatpush1.msra.mxu0 0.0
        %222 = vmatprep.subr.mxu0 0.0
        %223 = vmatpush1.msra.mxu0 0.0
        %224 = vmatprep.subr.mxu0 0.0
        %225 = vmatpush1.msra.mxu0 0.0
        %226 = vmatprep.subr.mxu0 0.0
        %227 = vmatpush1.msra.mxu0 0.0
        %228 = vmatprep.subr.mxu0 0.0
        %229 = vmatpush1.msra.mxu0 0.0
        %230 = vmatprep.subr.mxu0 0.0
        %231 = vmatpush1.msra.mxu0 0.0
        %232 = vmatprep.subr.mxu0 0.0
        %233 = vmatpush1.msra.mxu0 0.0
        %234 = vmatprep.subr.mxu0 0.0
        %235 = vmatpush1.msra.mxu0 0.0
        %236 = vmatprep.subr.mxu0 0.0
        %237 = vmatpush1.msra.mxu0 0.0
        %238 = vmatprep.subr.mxu0 0.0
        %239 = vmatpush1.msra.mxu0 0.0
        %240 = vmatprep.subr.mxu0 0.0
        %241 = vmatpush1.msra.mxu0 0.0
        %242 = vmatprep.subr.mxu0 0.0
        %243 = vmatpush1.msra.mxu0 0.0
        %244 = vmatprep.subr.mxu0 0.0
        %245 = vmatpush1.msra.mxu0 0.0
        %246 = vmatprep.mubr.f32.mxu0 0.0
        %247 = vmatmul.mubr.f32.gmra.mrb[0].mxu0 %v176
        %v248 = vpop.f32.mrb[0].mxu0
        %v249 = vadd.f32 0.0, %v248
        %v250 = vpop.f32.mrb[0].mxu0
        %251 = vdwg.mxu0
        %252 = vst [vmem:[%s161] sm:$0xff] %v249
        %s253 = sand.u32 %s90, 1
        %s254 = scalar_lea.sflag [#allocation3], %s253
        %s255 = sand.u32 %s90, 1
        %s256 = smul.addr %s255, 8
        %s257 = scalar_lea.vmem [#allocation2], %s256
        // Predicated region
        $region29: #{token_embedding.1} parent=27 // pred_check
          %p258 = pneg %p100
        $region30: #{token_embedding.1} parent=27 // pred_check_branch
          %260 = sbr.rel (%p258) target = $region32
        $region31: #{token_embedding.1} parent=27 // pred_region
          %s262 = ssub.s32 128, 128
          %263 = vsyncadd %s254, %s262
          %s264 = sadd.s32 %s20, %s21
          %s265 = smul.addr %s264, 128
          %s266 = scalar_lea.hbm %s2, %s265
          %s268 = sshll.u32 %s257, 4
          %s269 = int_to_ptr.vmem [resolvable:$true] %s268
          %271 = dma.vmem_to_hbm [thread:$0]  %s269, 128, %s266, %s254
        $region32: #{token_embedding.1} parent=27 // pred_fallthru
          _
      $region28: #{token_embedding.1} parent=5 // pred_fallthru
        _
      %p272 = scmp.le.s32.totalorder 2, %s11
      // Predicated region
      $region33: #{token_embedding.1} parent=5 // pred_check
        %p273 = pneg %p272
      $region34: #{token_embedding.1} parent=5 // pred_check_branch
        %275 = sbr.rel (%p273) target = $region36
      $region35: #{token_embedding.1} parent=5 // pred_region
        %s276 = ssub.s32 %s11, 2
        // Predicated region
        $region37: #{token_embedding.1} parent=35 // pred_check
          %p277 = pneg %p106
        $region38: #{token_embedding.1} parent=35 // pred_check_branch
          %279 = sbr.rel (%p277) target = $region40
        $region39: #{token_embedding.1} parent=35 // pred_region
          %s280 = sand.u32 %s91, 1
          %s281 = scalar_lea.sflag [#allocation3], %s280
          %s282 = sand.u32 %s91, 1
          %s283 = smul.addr %s282, 8
          %s284 = scalar_lea.vmem [#allocation2], %s283
          %285 = dma.done %s281, 128
        $region40: #{token_embedding.1} parent=35 // pred_fallthru
          _
      $region36: #{token_embedding.1} parent=5 // pred_fallthru
        _
    $region6: #{token_embedding.1} parent=1 // loop_footer
      %s15 = sadd.s32 1, %s11
    $region7: #{token_embedding.1} parent=1 // loop_footer_branch
      %10 = sbr.rel target = $region3
    $region8: #{token_embedding.1} parent=1 // loop_exit
      _
    %286 = vsyncpa [#allocation3], 1
    %s287 = scalar_lea.sflag [#allocation3], 1
    %288 = vsyncpa %s287, 1

</llo_original>
